<compile_context>
chip_gen: v6e
topology: v6e:2x2x1
jax: 0.10.0
libtpu: 0.0.40
codegen_flags: <defaults>
</compile_context>

<pallas_src>
import functools
import math

import jax
import jax.numpy as jnp
from jax.experimental import pallas as pl
from jax.experimental.pallas import tpu as pltpu

_LANES = 128


def _embedding_kernel(x_ref, o_ref, *, freq_bands, trig_dtype):
    # x_ref: (tile, 128) ; o_ref: (P, tile, 128) with P = 2*len(freq_bands)+1
    x = x_ref[...]
    o_ref[0] = x                         # identity part, stored directly
    xf = x.astype(trig_dtype)            # transcendental precision (f32 default)
    for k, freq in enumerate(freq_bands):  # static python floats -> unrolled
        fx = freq * xf
        o_ref[1 + 2 * k] = jnp.sin(fx).astype(o_ref.dtype)
        o_ref[2 + 2 * k] = jnp.cos(fx).astype(o_ref.dtype)


def make_embedding(in_channels, N_freqs, logscale=True, *,
                   row_tile=2048,
                   min_grid_steps=8,
                   vmem_budget_bytes=12 * 1024 * 1024,
                   low_precision_trig=False,
                   part_major=False):
    """Returns (embed_fn, freq_bands, out_channels).

    embed_fn(x): x (..., in_channels) -> (..., out_channels) in the PyTorch
    concatenated layout (or (P, ..., in_channels) if part_major=True).
    """
    if logscale:
        freq_bands = tuple(float(2.0 ** i) for i in range(N_freqs))
    else:
        freq_bands = tuple(
            float(v) for v in jnp.linspace(1.0, 2.0 ** (N_freqs - 1), N_freqs)
        )
    n_parts = 2 * N_freqs + 1
    out_channels = in_channels * n_parts

    def embed_impl(x):
        assert x.shape[-1] == in_channels
        lead = x.shape[:-1]
        n = math.prod(lead) if lead else 1
        total = n * in_channels
        dtype = x.dtype
        itemsize = jnp.dtype(dtype).itemsize

        if total == 0:
            return jnp.zeros((*lead, out_channels), dtype)

        # sublane pack granularity: 8 rows f32, 16 bf16, 32 int8/fp8
        sub = max(8, 32 // itemsize)
        trig_dtype = (dtype if (low_precision_trig and dtype != jnp.float32)
                      else jnp.float32)

        # ---- lane-dense rows; pad only to the sublane-pack row granularity
        n_rows = pl.cdiv(total, _LANES)
        n_rows_r = ((n_rows + sub - 1) // sub) * sub
        total_pad = n_rows_r * _LANES

        # ---- tile sizing: double-buffered (in + out) blocks within budget
        per_row_bytes = 2 * (1 + n_parts) * _LANES * itemsize   # dbl-buffered
        max_tile = max(sub, (vmem_budget_bytes // per_row_bytes) // sub * sub)
        tile = max(sub, (min(row_tile, max_tile) // sub) * sub)
        # keep >= ~min_grid_steps grid steps (megacore sharding / pipelining)
        tgt = ((pl.cdiv(n_rows_r, min_grid_steps) + sub - 1) // sub) * sub
        tile = min(tile, max(sub, tgt))
        tile = min(tile, n_rows_r)

        grid = (pl.cdiv(n_rows_r, tile),)

        flat = x.reshape(-1)
        if total_pad != total:
            flat = jnp.pad(flat, (0, total_pad - total))
        x2 = flat.reshape(n_rows_r, _LANES)

        in_block_bytes = tile * _LANES * itemsize
        out_block_bytes = n_parts * in_block_bytes
        vmem_limit = int(min(100 << 20,
                             max(16 << 20,
                                 2 * (in_block_bytes + out_block_bytes) + (2 << 20))))

        kernel = functools.partial(_embedding_kernel,
                                   freq_bands=freq_bands,
                                   trig_dtype=trig_dtype)

        cost = pl.CostEstimate(
            flops=2 * N_freqs * total,
            transcendentals=2 * N_freqs * total,
            bytes_accessed=(1 + n_parts) * total * itemsize,
        )

        out = pl.pallas_call(
            kernel,
            out_shape=jax.ShapeDtypeStruct((n_parts, n_rows_r, _LANES), dtype),
            grid_spec=pltpu.PrefetchScalarGridSpec(
                num_scalar_prefetch=0,
                grid=grid,
                in_specs=[pl.BlockSpec((tile, _LANES), lambda i: (i, 0))],
                out_specs=pl.BlockSpec((n_parts, tile, _LANES),
                                       lambda i: (0, i, 0)),
            ),
            compiler_params=pltpu.CompilerParams(
                dimension_semantics=("parallel",),
                vmem_limit_bytes=vmem_limit,
            ),
            cost_estimate=cost,
        )(x2)

        # ---- reassemble the PyTorch channel-concatenated layout.
        # out[p] is func_p applied to the flattened x stream.  Under jit the
        # slice + transpose below fuse into a single copy; part_major=True
        # avoids even that copy.
        out = out.reshape(n_parts, total_pad)
        if total_pad != total:
            out = out[:, :total]
        if part_major:
            return out.reshape(n_parts, *lead, in_channels)
        out = out.reshape(n_parts, n, in_channels)
        out = jnp.transpose(out, (1, 0, 2))                      # (N, P, C)
        return out.reshape(*lead, out_channels)

    return jax.jit(embed_impl), freq_bands, out_channels


def _reference(x, freq_bands):
    parts = [x]
    for f in freq_bands:
        parts.append(jnp.sin(f * x))
        parts.append(jnp.cos(f * x))
    return jnp.concatenate(parts, axis=-1)


if __name__ == "__main__":
    key = jax.random.PRNGKey(0)

    # Case 1: small NeRF-like point batch (matches the module's typical use).
    in_channels, N_freqs = 3, 4
    batch, seq = 2, 8
    x1 = jax.random.normal(key, (batch, seq, in_channels), dtype=jnp.float32)
    embed1, fb1, oc1 = make_embedding(in_channels, N_freqs, logscale=True)
    y1 = jax.block_until_ready(embed1(x1))
    assert y1.shape == (batch, seq, oc1), y1.shape
    assert jnp.allclose(y1, _reference(x1, fb1), atol=1e-5, rtol=1e-5), float(
        jnp.max(jnp.abs(y1 - _reference(x1, fb1))))

    # Case 2: unaligned total (exercises row padding + multi-step grid) and
    # non-logscale frequency bands.
    k2 = jax.random.PRNGKey(1)
    x2 = jax.random.normal(k2, (40, 33, in_channels), dtype=jnp.float32)
    embed2, fb2, oc2 = make_embedding(in_channels, 10, logscale=False)
    y2 = jax.block_until_ready(embed2(x2))
    assert y2.shape == (40, 33, oc2), y2.shape
    assert jnp.allclose(y2, _reference(x2, fb2), atol=1e-5, rtol=1e-5), float(
        jnp.max(jnp.abs(y2 - _reference(x2, fb2))))

    print("KERNEL_OK")
</pallas_src>

<mosaic_0001>
module attributes {stable_mosaic.version = 11 : i64} {
  func.func @_embedding_kernel(%arg0: i32, %arg1: memref<8x128xf32, #tpu.memory_space<vmem>>, %arg2: memref<9x8x128xf32, #tpu.memory_space<vmem>>) attributes {dimension_semantics = [#tpu.dimension_semantics<parallel>], iteration_bounds = array<i64: 1>, scalar_prefetch = 0 : i64, scratch_operands = 0 : i64, tpu.core_type = #tpu.core_type<tc>, window_params = [{transform_indices = @transform_0, window_bounds = array<i64: 8, 128>}, {transform_indices = @transform_1, window_bounds = array<i64: 9, 8, 128>}]} {
    %c0 = arith.constant 0 : index
    %c0_0 = arith.constant 0 : index
    %0 = vector.load %arg1[%c0, %c0_0] : memref<8x128xf32, #tpu.memory_space<vmem>>, vector<8x128xf32>
    %c0_1 = arith.constant 0 : index
    %c0_2 = arith.constant 0 : index
    %c0_3 = arith.constant 0 : index
    %1 = vector.load %arg2[%c0_1, %c0_2, %c0_3] : memref<9x8x128xf32, #tpu.memory_space<vmem>>, vector<1x8x128xf32>
    %2 = vector.shape_cast %1 : vector<1x8x128xf32> to vector<8x128xf32>
    %3 = vector.shape_cast %0 : vector<8x128xf32> to vector<1x8x128xf32>
    tpu.vector_store %arg2[%c0_1, %c0_2, %c0_3], %3 {strides = array<i32>} : memref<9x8x128xf32, #tpu.memory_space<vmem>>, vector<1x8x128xf32>,
    %cst = arith.constant 1.000000e+00 : f32
    %4 = vector.broadcast %cst : f32 to vector<8x128xf32>
    %5 = arith.mulf %4, %0 : vector<8x128xf32>
    %6 = math.sin %5 : vector<8x128xf32>
    %c1 = arith.constant 1 : index
    %c0_4 = arith.constant 0 : index
    %c0_5 = arith.constant 0 : index
    %7 = vector.load %arg2[%c1, %c0_4, %c0_5] : memref<9x8x128xf32, #tpu.memory_space<vmem>>, vector<1x8x128xf32>
    %8 = vector.shape_cast %7 : vector<1x8x128xf32> to vector<8x128xf32>
    %9 = vector.shape_cast %6 : vector<8x128xf32> to vector<1x8x128xf32>
    tpu.vector_store %arg2[%c1, %c0_4, %c0_5], %9 {strides = array<i32>} : memref<9x8x128xf32, #tpu.memory_space<vmem>>, vector<1x8x128xf32>,
    %10 = math.cos %5 : vector<8x128xf32>
    %c2 = arith.constant 2 : index
    %c0_6 = arith.constant 0 : index
    %c0_7 = arith.constant 0 : index
    %11 = vector.load %arg2[%c2, %c0_6, %c0_7] : memref<9x8x128xf32, #tpu.memory_space<vmem>>, vector<1x8x128xf32>
    %12 = vector.shape_cast %11 : vector<1x8x128xf32> to vector<8x128xf32>
    %13 = vector.shape_cast %10 : vector<8x128xf32> to vector<1x8x128xf32>
    tpu.vector_store %arg2[%c2, %c0_6, %c0_7], %13 {strides = array<i32>} : memref<9x8x128xf32, #tpu.memory_space<vmem>>, vector<1x8x128xf32>,
    %cst_8 = arith.constant 2.000000e+00 : f32
    %14 = vector.broadcast %cst_8 : f32 to vector<8x128xf32>
    %15 = arith.mulf %14, %0 : vector<8x128xf32>
    %16 = math.sin %15 : vector<8x128xf32>
    %c3 = arith.constant 3 : index
    %c0_9 = arith.constant 0 : index
    %c0_10 = arith.constant 0 : index
    %17 = vector.load %arg2[%c3, %c0_9, %c0_10] : memref<9x8x128xf32, #tpu.memory_space<vmem>>, vector<1x8x128xf32>
    %18 = vector.shape_cast %17 : vector<1x8x128xf32> to vector<8x128xf32>
    %19 = vector.shape_cast %16 : vector<8x128xf32> to vector<1x8x128xf32>
    tpu.vector_store %arg2[%c3, %c0_9, %c0_10], %19 {strides = array<i32>} : memref<9x8x128xf32, #tpu.memory_space<vmem>>, vector<1x8x128xf32>,
    %20 = math.cos %15 : vector<8x128xf32>
    %c4 = arith.constant 4 : index
    %c0_11 = arith.constant 0 : index
    %c0_12 = arith.constant 0 : index
    %21 = vector.load %arg2[%c4, %c0_11, %c0_12] : memref<9x8x128xf32, #tpu.memory_space<vmem>>, vector<1x8x128xf32>
    %22 = vector.shape_cast %21 : vector<1x8x128xf32> to vector<8x128xf32>
    %23 = vector.shape_cast %20 : vector<8x128xf32> to vector<1x8x128xf32>
    tpu.vector_store %arg2[%c4, %c0_11, %c0_12], %23 {strides = array<i32>} : memref<9x8x128xf32, #tpu.memory_space<vmem>>, vector<1x8x128xf32>,
    %cst_13 = arith.constant 4.000000e+00 : f32
    %24 = vector.broadcast %cst_13 : f32 to vector<8x128xf32>
    %25 = arith.mulf %24, %0 : vector<8x128xf32>
    %26 = math.sin %25 : vector<8x128xf32>
    %c5 = arith.constant 5 : index
    %c0_14 = arith.constant 0 : index
    %c0_15 = arith.constant 0 : index
    %27 = vector.load %arg2[%c5, %c0_14, %c0_15] : memref<9x8x128xf32, #tpu.memory_space<vmem>>, vector<1x8x128xf32>
    %28 = vector.shape_cast %27 : vector<1x8x128xf32> to vector<8x128xf32>
    %29 = vector.shape_cast %26 : vector<8x128xf32> to vector<1x8x128xf32>
    tpu.vector_store %arg2[%c5, %c0_14, %c0_15], %29 {strides = array<i32>} : memref<9x8x128xf32, #tpu.memory_space<vmem>>, vector<1x8x128xf32>,
    %30 = math.cos %25 : vector<8x128xf32>
    %c6 = arith.constant 6 : index
    %c0_16 = arith.constant 0 : index
    %c0_17 = arith.constant 0 : index
    %31 = vector.load %arg2[%c6, %c0_16, %c0_17] : memref<9x8x128xf32, #tpu.memory_space<vmem>>, vector<1x8x128xf32>
    %32 = vector.shape_cast %31 : vector<1x8x128xf32> to vector<8x128xf32>
    %33 = vector.shape_cast %30 : vector<8x128xf32> to vector<1x8x128xf32>
    tpu.vector_store %arg2[%c6, %c0_16, %c0_17], %33 {strides = array<i32>} : memref<9x8x128xf32, #tpu.memory_space<vmem>>, vector<1x8x128xf32>,
    %cst_18 = arith.constant 8.000000e+00 : f32
    %34 = vector.broadcast %cst_18 : f32 to vector<8x128xf32>
    %35 = arith.mulf %34, %0 : vector<8x128xf32>
    %36 = math.sin %35 : vector<8x128xf32>
    %c7 = arith.constant 7 : index
    %c0_19 = arith.constant 0 : index
    %c0_20 = arith.constant 0 : index
    %37 = vector.load %arg2[%c7, %c0_19, %c0_20] : memref<9x8x128xf32, #tpu.memory_space<vmem>>, vector<1x8x128xf32>
    %38 = vector.shape_cast %37 : vector<1x8x128xf32> to vector<8x128xf32>
    %39 = vector.shape_cast %36 : vector<8x128xf32> to vector<1x8x128xf32>
    tpu.vector_store %arg2[%c7, %c0_19, %c0_20], %39 {strides = array<i32>} : memref<9x8x128xf32, #tpu.memory_space<vmem>>, vector<1x8x128xf32>,
    %40 = math.cos %35 : vector<8x128xf32>
    %c8 = arith.constant 8 : index
    %c0_21 = arith.constant 0 : index
    %c0_22 = arith.constant 0 : index
    %41 = vector.load %arg2[%c8, %c0_21, %c0_22] : memref<9x8x128xf32, #tpu.memory_space<vmem>>, vector<1x8x128xf32>
    %42 = vector.shape_cast %41 : vector<1x8x128xf32> to vector<8x128xf32>
    %43 = vector.shape_cast %40 : vector<8x128xf32> to vector<1x8x128xf32>
    tpu.vector_store %arg2[%c8, %c0_21, %c0_22], %43 {strides = array<i32>} : memref<9x8x128xf32, #tpu.memory_space<vmem>>, vector<1x8x128xf32>,
    return
  }
  func.func @transform_0(%arg0: i32) -> (i32, i32) {
    %c0_i32 = arith.constant 0 : i32
    %c0_i32_0 = arith.constant 0 : i32
    return %arg0, %c0_i32 : i32, i32
  }
  func.func @transform_1(%arg0: i32) -> (i32, i32, i32) {
    %c0_i32 = arith.constant 0 : i32
    %c0_i32_0 = arith.constant 0 : i32
    %c0_i32_1 = arith.constant 0 : i32
    return %c0_i32, %arg0, %c0_i32_0 : i32, i32, i32
  }
}

</mosaic_0001>

<llo_original>
// kernel: embed_impl.1
$region0: #{embed_impl.1}
  #allocation0 [shape = 'u32[]', space=smem, size = 0x4, offset = 0x4, fixed_abs, tag = 'smem constant byte address 0x4 - core index']
  #allocation1 [shape = 'u32[144,128]{1,0:T(1,128)}', space=vmem, size = 0x12000, scoped, tag = 'internal scratch']
  %s0 = inlined_call_operand.vmem [shape: f32[8,128], index: 0, kind: input, shape index: {}]
  %s1 = inlined_call_operand.vmem [shape: f32[9,8,128], index: 1, kind: output, shape index: {}]
  %s2 = sld [smem:[#allocation0]]
  $region14: #{embed_impl.1} parent=0
    _
  %s4 = ssub.s32 1, %s2
  %s5 = scalar_select 0, %s4, %s2
  // Predicated region
  $region2: #{embed_impl.1} parent=0 // pred_check
    _
  $region3: #{embed_impl.1} parent=0 // pred_check_branch
    %7 = sbr.rel (0) target = $region5
  $region4: #{embed_impl.1} parent=0 // pred_region
    _
  $region5: #{embed_impl.1} parent=0 // pred_fallthru
    _
  %v8 = vld [vmem:[%s0] sm:$0xff]
  %9 = vst [vmem:[%s1] sm:$0xff] %v8
  %v10 = vand.u32 2147483647, %v8
  %vm11 = vcmp.le.f32.partialorder %v10, 0.7853982
  %vm12 = vcmp.lt.s32.totalorder %v8, 0
  %v13 = vand.u32 %v8, 2139095040
  %v14 = vshrl.u32 %v13, 23
  %v15 = vsub.s32 %v14, 127
  %v16 = vand.u32 2147483647, %v8
  %v17 = vand.u32 %v16, 8388607
  %v18 = vor.u32 %v17, 8388608
  %v19 = vsub.s32 0, %v18
  %v20 = vadd.s32 %v15, 1
  %vm21 = vcmp.gt.s32.totalorder %v20, 0
  %v22 = vsel %vm21, %v20, 0
  %v23 = vshrl.u32 %v22, 5
  %v24 = vand.u32 %v22, 31
  %v25 = vsub.s32 32, %v24
  %v26 = vshrl.u32 683565275, %v25
  %v27 = vshll.u32 683565275, %v24
  %v28 = vshrl.u32 2475754826, %v25
  %v29 = vor.u32 %v27, %v28
  %v30 = vshll.u32 2475754826, %v24
  %v31 = vshrl.u32 2131351028, %v25
  %v32 = vor.u32 %v30, %v31
  %v33 = vshll.u32 2131351028, %v24
  %v34 = vshrl.u32 2102212464, %v25
  %v35 = vor.u32 %v33, %v34
  %v36 = vshll.u32 2102212464, %v24
  %v37 = vshrl.u32 920167782, %v25
  %v38 = vor.u32 %v36, %v37
  %v39 = vshll.u32 920167782, %v24
  %v40 = vshrl.u32 1326507024, %v25
  %v41 = vor.u32 %v39, %v40
  %vm42 = vcmp.lt.s32.totalorder %v23, 1
  %vm43 = vcmp.lt.s32.totalorder %v23, 2
  %vm44 = vcmp.lt.s32.totalorder %v23, 3
  %vm45 = vcmp.lt.s32.totalorder %v23, 4
  %v46 = vsel %vm42, %v26, %v29
  %v47 = vsel %vm45, %v35, 2102212464
  %v48 = vsel %vm44, %v32, %v47
  %v49 = vsel %vm43, %v46, %v48
  %v50 = vsel %vm42, %v29, %v32
  %v51 = vsel %vm45, %v38, 920167782
  %v52 = vsel %vm44, %v35, %v51
  %v53 = vsel %vm43, %v50, %v52
  %v54 = vsel %vm42, %v32, %v35
  %v55 = vsel %vm45, %v41, 1326507024
  %v56 = vsel %vm44, %v38, %v55
  %v57 = vsel %vm43, %v54, %v56
  %v58 = vshll.u32 %v18, 8
  %v59 = vmul.u32.u64.compose %v58, %v57
  %v60 = vextract.low.u32 %v59
  %v61 = vextract.high.u32 %v59
  %v62 = vmul.u32.u64.compose %v58, %v53
  %v63 = vextract.low.u32 %v62
  %v64 = vextract.high.u32 %v62
  %v65 = vmul.u32 %v58, %v49
  %v66 = vadd.s32 %v61, %v63
  %vm67 = vc.u32 %v61, %v63
  %v68 = vadd.s32 %v64, 1
  %v69 = vsel %vm67, %v68, %v64
  %v70 = vadd.s32 %v65, %v69
  %v71 = vadd.s32 %v70, 536870912
  %v72 = vshrl.u32 %v71, 30
  %v73 = vshll.u32 %v72, 30
  %v74 = vsub.s32 %v70, %v73
  %vm75 = vcmp.lt.s32.totalorder %v74, 0
  %v76 = vsub.s32 0, %v74
  %v77 = vsel %vm75, %v76, %v74
  %v78 = vclz %v77
  %v79 = vsub.s32 %v78, 2
  %vm80 = vcmp.gt.s32.totalorder 0, %v79
  %v81 = vsel %vm80, 0, %v79
  %v82 = vsub.s32 32, %v81
  %v83 = vshll.u32 %v74, %v81
  %v84 = vshrl.u32 %v66, %v82
  %v85 = vor.u32 %v83, %v84
  %v86 = vsub.s32 4294967266, %v81
  %v87 = vadd.s32 %v86, 127
  %v88 = vshll.u32 %v87, 23
  %v89 = vor.u32 4788187, %v88
  %v90 = vand.u32 2147483647, %v89
  %v92 = vcvt.s32.f32 %v85
  %v93 = vmul.f32 %v92, %v90
  %v94 = vxor.u32 %v93, 2147483648
  %v95 = vsel %vm12, %v94, %v93
  %v96 = vsub.s32 4, %v72
  %v97 = vsel %vm12, %v96, %v72
  %v98 = vsel %vm11, %v8, %v95
  %v99 = vsel %vm11, 0, %v97
  %v100 = vcosq.f32.pop %v98
  %v101 = vsinq.f32.pop %v98
  %vm102 = vweird.f32 %v8
  %v103 = vadd.s32 %v99, 3
  %v104 = vand.u32 %v103, 3
  %vm105 = vcmp.lt.s32.totalorder %v104, 2
  %vm106 = vcmp.eq.s32.totalorder %v104, 0
  %v107 = vxor.u32 %v101, 2147483648
  %v108 = vsel %vm106, %v100, %v107
  %vm109 = vcmp.eq.s32.totalorder %v104, 2
  %v110 = vxor.u32 %v100, 2147483648
  %v111 = vsel %vm109, %v110, %v101
  %v112 = vsel %vm105, %v108, %v111
  %v113 = vsel %vm102, nan, %v112
  %s114 = scalar_lea.vmem %s1, 8
  %115 = vst [vmem:[%s114] sm:$0xff] %v113
  %v116 = vand.u32 2147483647, %v8
  %vm117 = vcmp.le.f32.partialorder %v116, 0.7853982
  %vm118 = vcmp.lt.s32.totalorder %v8, 0
  %v119 = vand.u32 %v8, 2139095040
  %v120 = vshrl.u32 %v119, 23
  %v121 = vsub.s32 %v120, 127
  %v122 = vand.u32 2147483647, %v8
  %v123 = vand.u32 %v122, 8388607
  %v124 = vor.u32 %v123, 8388608
  %v125 = vsub.s32 0, %v124
  %v126 = vadd.s32 %v121, 1
  %vm127 = vcmp.gt.s32.totalorder %v126, 0
  %v128 = vsel %vm127, %v126, 0
  %v129 = vshrl.u32 %v128, 5
  %v130 = vand.u32 %v128, 31
  %v131 = vsub.s32 32, %v130
  %v132 = vshrl.u32 683565275, %v131
  %v133 = vshll.u32 683565275, %v130
  %v134 = vshrl.u32 2475754826, %v131
  %v135 = vor.u32 %v133, %v134
  %v136 = vshll.u32 2475754826, %v130
  %v137 = vshrl.u32 2131351028, %v131
  %v138 = vor.u32 %v136, %v137
  %v139 = vshll.u32 2131351028, %v130
  %v140 = vshrl.u32 2102212464, %v131
  %v141 = vor.u32 %v139, %v140
  %v142 = vshll.u32 2102212464, %v130
  %v143 = vshrl.u32 920167782, %v131
  %v144 = vor.u32 %v142, %v143
  %v145 = vshll.u32 920167782, %v130
  %v146 = vshrl.u32 1326507024, %v131
  %v147 = vor.u32 %v145, %v146
  %vm148 = vcmp.lt.s32.totalorder %v129, 1
  %vm149 = vcmp.lt.s32.totalorder %v129, 2
  %vm150 = vcmp.lt.s32.totalorder %v129, 3
  %vm151 = vcmp.lt.s32.totalorder %v129, 4
  %v152 = vsel %vm148, %v132, %v135
  %v153 = vsel %vm151, %v141, 2102212464
  %v154 = vsel %vm150, %v138, %v153
  %v155 = vsel %vm149, %v152, %v154
  %v156 = vsel %vm148, %v135, %v138
  %v157 = vsel %vm151, %v144, 920167782
  %v158 = vsel %vm150, %v141, %v157
  %v159 = vsel %vm149, %v156, %v158
  %v160 = vsel %vm148, %v138, %v141
  %v161 = vsel %vm151, %v147, 1326507024
  %v162 = vsel %vm150, %v144, %v161
  %v163 = vsel %vm149, %v160, %v162
  %v164 = vshll.u32 %v124, 8
  %v165 = vmul.u32.u64.compose %v164, %v163
  %v166 = vextract.low.u32 %v165
  %v167 = vextract.high.u32 %v165
  %v168 = vmul.u32.u64.compose %v164, %v159
  %v169 = vextract.low.u32 %v168
  %v170 = vextract.high.u32 %v168
  %v171 = vmul.u32 %v164, %v155
  %v172 = vadd.s32 %v167, %v169
  %vm173 = vc.u32 %v167, %v169
  %v174 = vadd.s32 %v170, 1
  %v175 = vsel %vm173, %v174, %v170
  %v176 = vadd.s32 %v171, %v175
  %v177 = vadd.s32 %v176, 536870912
  %v178 = vshrl.u32 %v177, 30
  %v179 = vshll.u32 %v178, 30
  %v180 = vsub.s32 %v176, %v179
  %vm181 = vcmp.lt.s32.totalorder %v180, 0
  %v182 = vsub.s32 0, %v180
  %v183 = vsel %vm181, %v182, %v180
  %v184 = vclz %v183
  %v185 = vsub.s32 %v184, 2
  %vm186 = vcmp.gt.s32.totalorder 0, %v185
  %v187 = vsel %vm186, 0, %v185
  %v188 = vsub.s32 32, %v187
  %v189 = vshll.u32 %v180, %v187
  %v190 = vshrl.u32 %v172, %v188
  %v191 = vor.u32 %v189, %v190
  %v192 = vsub.s32 4294967266, %v187
  %v193 = vadd.s32 %v192, 127
  %v194 = vshll.u32 %v193, 23
  %v195 = vor.u32 4788187, %v194
  %v196 = vand.u32 2147483647, %v195
  %v198 = vcvt.s32.f32 %v191
  %v199 = vmul.f32 %v198, %v196
  %v200 = vxor.u32 %v199, 2147483648
  %v201 = vsel %vm118, %v200, %v199
  %v202 = vsub.s32 4, %v178
  %v203 = vsel %vm118, %v202, %v178
  %v204 = vsel %vm117, %v8, %v201
  %v205 = vsel %vm117, 0, %v203
  %v206 = vcosq.f32.pop %v204
  %v207 = vsinq.f32.pop %v204
  %vm208 = vweird.f32 %v8
  %v209 = vand.u32 %v205, 3
  %vm210 = vcmp.lt.s32.totalorder %v209, 2
  %vm211 = vcmp.eq.s32.totalorder %v209, 0
  %v212 = vxor.u32 %v207, 2147483648
  %v213 = vsel %vm211, %v206, %v212
  %vm214 = vcmp.eq.s32.totalorder %v209, 2
  %v215 = vxor.u32 %v206, 2147483648
  %v216 = vsel %vm214, %v215, %v207
  %v217 = vsel %vm210, %v213, %v216
  %v218 = vsel %vm208, nan, %v217
  %s219 = scalar_lea.vmem %s1, 16
  %220 = vst [vmem:[%s219] sm:$0xff] %v218
  %v221 = vmul.f32 %v8, 2.0
  %v222 = vand.u32 2147483647, %v221
  %vm223 = vcmp.le.f32.partialorder %v222, 0.7853982
  %vm224 = vcmp.lt.s32.totalorder %v221, 0
  %v225 = vand.u32 %v221, 2139095040
  %v226 = vshrl.u32 %v225, 23
  %v227 = vsub.s32 %v226, 127
  %v228 = vand.u32 2147483647, %v221
  %v229 = vand.u32 %v228, 8388607
  %v230 = vor.u32 %v229, 8388608
  %v231 = vsub.s32 0, %v230
  %v232 = vadd.s32 %v227, 1
  %vm233 = vcmp.gt.s32.totalorder %v232, 0
  %v234 = vsel %vm233, %v232, 0
  %v235 = vshrl.u32 %v234, 5
  %v236 = vand.u32 %v234, 31
  %v237 = vsub.s32 32, %v236
  %v238 = vshrl.u32 683565275, %v237
  %v239 = vshll.u32 683565275, %v236
  %v240 = vshrl.u32 2475754826, %v237
  %v241 = vor.u32 %v239, %v240
  %v242 = vshll.u32 2475754826, %v236
  %v243 = vshrl.u32 2131351028, %v237
  %v244 = vor.u32 %v242, %v243
  %v245 = vshll.u32 2131351028, %v236
  %v246 = vshrl.u32 2102212464, %v237
  %v247 = vor.u32 %v245, %v246
  %v248 = vshll.u32 2102212464, %v236
  %v249 = vshrl.u32 920167782, %v237
  %v250 = vor.u32 %v248, %v249
  %v251 = vshll.u32 920167782, %v236
  %v252 = vshrl.u32 1326507024, %v237
  %v253 = vor.u32 %v251, %v252
  %vm254 = vcmp.lt.s32.totalorder %v235, 1
  %vm255 = vcmp.lt.s32.totalorder %v235, 2
  %vm256 = vcmp.lt.s32.totalorder %v235, 3
  %vm257 = vcmp.lt.s32.totalorder %v235, 4
  %v258 = vsel %vm254, %v238, %v241
  %v259 = vsel %vm257, %v247, 2102212464
  %v260 = vsel %vm256, %v244, %v259
  %v261 = vsel %vm255, %v258, %v260
  %v262 = vsel %vm254, %v241, %v244
  %v263 = vsel %vm257, %v250, 920167782
  %v264 = vsel %vm256, %v247, %v263
  %v265 = vsel %vm255, %v262, %v264
  %v266 = vsel %vm254, %v244, %v247
  %v267 = vsel %vm257, %v253, 1326507024
  %v268 = vsel %vm256, %v250, %v267
  %v269 = vsel %vm255, %v266, %v268
  %v270 = vshll.u32 %v230, 8
  %v271 = vmul.u32.u64.compose %v270, %v269
  %v272 = vextract.low.u32 %v271
  %v273 = vextract.high.u32 %v271
  %v274 = vmul.u32.u64.compose %v270, %v265
  %v275 = vextract.low.u32 %v274
  %v276 = vextract.high.u32 %v274
  %v277 = vmul.u32 %v270, %v261
  %v278 = vadd.s32 %v273, %v275
  %vm279 = vc.u32 %v273, %v275
  %v280 = vadd.s32 %v276, 1
  %v281 = vsel %vm279, %v280, %v276
  %v282 = vadd.s32 %v277, %v281
  %v283 = vadd.s32 %v282, 536870912
  %v284 = vshrl.u32 %v283, 30
  %v285 = vshll.u32 %v284, 30
  %v286 = vsub.s32 %v282, %v285
  %vm287 = vcmp.lt.s32.totalorder %v286, 0
  %v288 = vsub.s32 0, %v286
  %v289 = vsel %vm287, %v288, %v286
  %v290 = vclz %v289
  %v291 = vsub.s32 %v290, 2
  %vm292 = vcmp.gt.s32.totalorder 0, %v291
  %v293 = vsel %vm292, 0, %v291
  %v294 = vsub.s32 32, %v293
  %v295 = vshll.u32 %v286, %v293
  %v296 = vshrl.u32 %v278, %v294
  %v297 = vor.u32 %v295, %v296
  %v298 = vsub.s32 4294967266, %v293
  %v299 = vadd.s32 %v298, 127
  %v300 = vshll.u32 %v299, 23
  %v301 = vor.u32 4788187, %v300
  %v302 = vand.u32 2147483647, %v301
  %v304 = vcvt.s32.f32 %v297
  %v305 = vmul.f32 %v304, %v302
  %v306 = vxor.u32 %v305, 2147483648
  %v307 = vsel %vm224, %v306, %v305
  %v308 = vsub.s32 4, %v284
  %v309 = vsel %vm224, %v308, %v284
  %v310 = vsel %vm223, %v221, %v307
  %v311 = vsel %vm223, 0, %v309
  %v312 = vcosq.f32.pop %v310
  %v313 = vsinq.f32.pop %v310
  %vm314 = vweird.f32 %v221
  %v315 = vadd.s32 %v311, 3
  %v316 = vand.u32 %v315, 3
  %vm317 = vcmp.lt.s32.totalorder %v316, 2
  %vm318 = vcmp.eq.s32.totalorder %v316, 0
  %v319 = vxor.u32 %v313, 2147483648
  %v320 = vsel %vm318, %v312, %v319
  %vm321 = vcmp.eq.s32.totalorder %v316, 2
  %v322 = vxor.u32 %v312, 2147483648
  %v323 = vsel %vm321, %v322, %v313
  %v324 = vsel %vm317, %v320, %v323
  %v325 = vsel %vm314, nan, %v324
  %s326 = scalar_lea.vmem %s1, 24
  %327 = vst [vmem:[%s326] sm:$0xff] %v325
  %v328 = vand.u32 2147483647, %v221
  %vm329 = vcmp.le.f32.partialorder %v328, 0.7853982
  %vm330 = vcmp.lt.s32.totalorder %v221, 0
  %v331 = vand.u32 %v221, 2139095040
  %v332 = vshrl.u32 %v331, 23
  %v333 = vsub.s32 %v332, 127
  %v334 = vand.u32 2147483647, %v221
  %v335 = vand.u32 %v334, 8388607
  %v336 = vor.u32 %v335, 8388608
  %v337 = vsub.s32 0, %v336
  %v338 = vadd.s32 %v333, 1
  %vm339 = vcmp.gt.s32.totalorder %v338, 0
  %v340 = vsel %vm339, %v338, 0
  %v341 = vshrl.u32 %v340, 5
  %v342 = vand.u32 %v340, 31
  %v343 = vsub.s32 32, %v342
  %v344 = vshrl.u32 683565275, %v343
  %v345 = vshll.u32 683565275, %v342
  %v346 = vshrl.u32 2475754826, %v343
  %v347 = vor.u32 %v345, %v346
  %v348 = vshll.u32 2475754826, %v342
  %v349 = vshrl.u32 2131351028, %v343
  %v350 = vor.u32 %v348, %v349
  %v351 = vshll.u32 2131351028, %v342
  %v352 = vshrl.u32 2102212464, %v343
  %v353 = vor.u32 %v351, %v352
  %v354 = vshll.u32 2102212464, %v342
  %v355 = vshrl.u32 920167782, %v343
  %v356 = vor.u32 %v354, %v355
  %v357 = vshll.u32 920167782, %v342
  %v358 = vshrl.u32 1326507024, %v343
  %v359 = vor.u32 %v357, %v358
  %vm360 = vcmp.lt.s32.totalorder %v341, 1
  %vm361 = vcmp.lt.s32.totalorder %v341, 2
  %vm362 = vcmp.lt.s32.totalorder %v341, 3
  %vm363 = vcmp.lt.s32.totalorder %v341, 4
  %v364 = vsel %vm360, %v344, %v347
  %v365 = vsel %vm363, %v353, 2102212464
  %v366 = vsel %vm362, %v350, %v365
  %v367 = vsel %vm361, %v364, %v366
  %v368 = vsel %vm360, %v347, %v350
  %v369 = vsel %vm363, %v356, 920167782
  %v370 = vsel %vm362, %v353, %v369
  %v371 = vsel %vm361, %v368, %v370
  %v372 = vsel %vm360, %v350, %v353
  %v373 = vsel %vm363, %v359, 1326507024
  %v374 = vsel %vm362, %v356, %v373
  %v375 = vsel %vm361, %v372, %v374
  %v376 = vshll.u32 %v336, 8
  %v377 = vmul.u32.u64.compose %v376, %v375
  %v378 = vextract.low.u32 %v377
  %v379 = vextract.high.u32 %v377
  %v380 = vmul.u32.u64.compose %v376, %v371
  %v381 = vextract.low.u32 %v380
  %v382 = vextract.high.u32 %v380
  %v383 = vmul.u32 %v376, %v367
  %v384 = vadd.s32 %v379, %v381
  %vm385 = vc.u32 %v379, %v381
  %v386 = vadd.s32 %v382, 1
  %v387 = vsel %vm385, %v386, %v382
  %v388 = vadd.s32 %v383, %v387
  %v389 = vadd.s32 %v388, 536870912
  %v390 = vshrl.u32 %v389, 30
  %v391 = vshll.u32 %v390, 30
  %v392 = vsub.s32 %v388, %v391
  %vm393 = vcmp.lt.s32.totalorder %v392, 0
  %v394 = vsub.s32 0, %v392
  %v395 = vsel %vm393, %v394, %v392
  %v396 = vclz %v395
  %v397 = vsub.s32 %v396, 2
  %vm398 = vcmp.gt.s32.totalorder 0, %v397
  %v399 = vsel %vm398, 0, %v397
  %v400 = vsub.s32 32, %v399
  %v401 = vshll.u32 %v392, %v399
  %v402 = vshrl.u32 %v384, %v400
  %v403 = vor.u32 %v401, %v402
  %v404 = vsub.s32 4294967266, %v399
  %v405 = vadd.s32 %v404, 127
  %v406 = vshll.u32 %v405, 23
  %v407 = vor.u32 4788187, %v406
  %v408 = vand.u32 2147483647, %v407
  %v410 = vcvt.s32.f32 %v403
  %v411 = vmul.f32 %v410, %v408
  %v412 = vxor.u32 %v411, 2147483648
  %v413 = vsel %vm330, %v412, %v411
  %v414 = vsub.s32 4, %v390
  %v415 = vsel %vm330, %v414, %v390
  %v416 = vsel %vm329, %v221, %v413
  %v417 = vsel %vm329, 0, %v415
  %v418 = vcosq.f32.pop %v416
  %v419 = vsinq.f32.pop %v416
  %vm420 = vweird.f32 %v221
  %v421 = vand.u32 %v417, 3
  %vm422 = vcmp.lt.s32.totalorder %v421, 2
  %vm423 = vcmp.eq.s32.totalorder %v421, 0
  %v424 = vxor.u32 %v419, 2147483648
  %v425 = vsel %vm423, %v418, %v424
  %vm426 = vcmp.eq.s32.totalorder %v421, 2
  %v427 = vxor.u32 %v418, 2147483648
  %v428 = vsel %vm426, %v427, %v419
  %v429 = vsel %vm422, %v425, %v428
  %v430 = vsel %vm420, nan, %v429
  %s431 = scalar_lea.vmem %s1, 32
  %432 = vst [vmem:[%s431] sm:$0xff] %v430
  %v433 = vmul.f32 %v8, 4.0
  %v434 = vand.u32 2147483647, %v433
  %vm435 = vcmp.le.f32.partialorder %v434, 0.7853982
  %vm436 = vcmp.lt.s32.totalorder %v433, 0
  %v437 = vand.u32 %v433, 2139095040
  %v438 = vshrl.u32 %v437, 23
  %v439 = vsub.s32 %v438, 127
  %v440 = vand.u32 2147483647, %v433
  %v441 = vand.u32 %v440, 8388607
  %v442 = vor.u32 %v441, 8388608
  %v443 = vsub.s32 0, %v442
  %v444 = vadd.s32 %v439, 1
  %vm445 = vcmp.gt.s32.totalorder %v444, 0
  %v446 = vsel %vm445, %v444, 0
  %v447 = vshrl.u32 %v446, 5
  %v448 = vand.u32 %v446, 31
  %v449 = vsub.s32 32, %v448
  %v450 = vshrl.u32 683565275, %v449
  %v451 = vshll.u32 683565275, %v448
  %v452 = vshrl.u32 2475754826, %v449
  %v453 = vor.u32 %v451, %v452
  %v454 = vshll.u32 2475754826, %v448
  %v455 = vshrl.u32 2131351028, %v449
  %v456 = vor.u32 %v454, %v455
  %v457 = vshll.u32 2131351028, %v448
  %v458 = vshrl.u32 2102212464, %v449
  %v459 = vor.u32 %v457, %v458
  %v460 = vshll.u32 2102212464, %v448
  %v461 = vshrl.u32 920167782, %v449
  %v462 = vor.u32 %v460, %v461
  %v463 = vshll.u32 920167782, %v448
  %v464 = vshrl.u32 1326507024, %v449
  %v465 = vor.u32 %v463, %v464
  %vm466 = vcmp.lt.s32.totalorder %v447, 1
  %vm467 = vcmp.lt.s32.totalorder %v447, 2
  %vm468 = vcmp.lt.s32.totalorder %v447, 3
  %vm469 = vcmp.lt.s32.totalorder %v447, 4
  %v470 = vsel %vm466, %v450, %v453
  %v471 = vsel %vm469, %v459, 2102212464
  %v472 = vsel %vm468, %v456, %v471
  %v473 = vsel %vm467, %v470, %v472
  %v474 = vsel %vm466, %v453, %v456
  %v475 = vsel %vm469, %v462, 920167782
  %v476 = vsel %vm468, %v459, %v475
  %v477 = vsel %vm467, %v474, %v476
  %v478 = vsel %vm466, %v456, %v459
  %v479 = vsel %vm469, %v465, 1326507024
  %v480 = vsel %vm468, %v462, %v479
  %v481 = vsel %vm467, %v478, %v480
  %v482 = vshll.u32 %v442, 8
  %v483 = vmul.u32.u64.compose %v482, %v481
  %v484 = vextract.low.u32 %v483
  %v485 = vextract.high.u32 %v483
  %v486 = vmul.u32.u64.compose %v482, %v477
  %v487 = vextract.low.u32 %v486
  %v488 = vextract.high.u32 %v486
  %v489 = vmul.u32 %v482, %v473
  %v490 = vadd.s32 %v485, %v487
  %vm491 = vc.u32 %v485, %v487
  %v492 = vadd.s32 %v488, 1
  %v493 = vsel %vm491, %v492, %v488
  %v494 = vadd.s32 %v489, %v493
  %v495 = vadd.s32 %v494, 536870912
  %v496 = vshrl.u32 %v495, 30
  %v497 = vshll.u32 %v496, 30
  %v498 = vsub.s32 %v494, %v497
  %vm499 = vcmp.lt.s32.totalorder %v498, 0
  %v500 = vsub.s32 0, %v498
  %v501 = vsel %vm499, %v500, %v498
  %v502 = vclz %v501
  %v503 = vsub.s32 %v502, 2
  %vm504 = vcmp.gt.s32.totalorder 0, %v503
  %v505 = vsel %vm504, 0, %v503
  %v506 = vsub.s32 32, %v505
  %v507 = vshll.u32 %v498, %v505
  %v508 = vshrl.u32 %v490, %v506
  %v509 = vor.u32 %v507, %v508
  %v510 = vsub.s32 4294967266, %v505
  %v511 = vadd.s32 %v510, 127
  %v512 = vshll.u32 %v511, 23
  %v513 = vor.u32 4788187, %v512
  %v514 = vand.u32 2147483647, %v513
  %v516 = vcvt.s32.f32 %v509
  %v517 = vmul.f32 %v516, %v514
  %v518 = vxor.u32 %v517, 2147483648
  %v519 = vsel %vm436, %v518, %v517
  %v520 = vsub.s32 4, %v496
  %v521 = vsel %vm436, %v520, %v496
  %v522 = vsel %vm435, %v433, %v519
  %v523 = vsel %vm435, 0, %v521
  %v524 = vcosq.f32.pop %v522
  %v525 = vsinq.f32.pop %v522
  %vm526 = vweird.f32 %v433
  %v527 = vadd.s32 %v523, 3
  %v528 = vand.u32 %v527, 3
  %vm529 = vcmp.lt.s32.totalorder %v528, 2
  %vm530 = vcmp.eq.s32.totalorder %v528, 0
  %v531 = vxor.u32 %v525, 2147483648
  %v532 = vsel %vm530, %v524, %v531
  %vm533 = vcmp.eq.s32.totalorder %v528, 2
  %v534 = vxor.u32 %v524, 2147483648
  %v535 = vsel %vm533, %v534, %v525
  %v536 = vsel %vm529, %v532, %v535
  %v537 = vsel %vm526, nan, %v536
  %s538 = scalar_lea.vmem %s1, 40
  %539 = vst [vmem:[%s538] sm:$0xff] %v537
  %v540 = vand.u32 2147483647, %v433
  %vm541 = vcmp.le.f32.partialorder %v540, 0.7853982
  %vm542 = vcmp.lt.s32.totalorder %v433, 0
  %v543 = vand.u32 %v433, 2139095040
  %v544 = vshrl.u32 %v543, 23
  %v545 = vsub.s32 %v544, 127
  %v546 = vand.u32 2147483647, %v433
  %v547 = vand.u32 %v546, 8388607
  %v548 = vor.u32 %v547, 8388608
  %v549 = vsub.s32 0, %v548
  %v550 = vadd.s32 %v545, 1
  %vm551 = vcmp.gt.s32.totalorder %v550, 0
  %v552 = vsel %vm551, %v550, 0
  %v553 = vshrl.u32 %v552, 5
  %v554 = vand.u32 %v552, 31
  %v555 = vsub.s32 32, %v554
  %v556 = vshrl.u32 683565275, %v555
  %v557 = vshll.u32 683565275, %v554
  %v558 = vshrl.u32 2475754826, %v555
  %v559 = vor.u32 %v557, %v558
  %v560 = vshll.u32 2475754826, %v554
  %v561 = vshrl.u32 2131351028, %v555
  %v562 = vor.u32 %v560, %v561
  %v563 = vshll.u32 2131351028, %v554
  %v564 = vshrl.u32 2102212464, %v555
  %v565 = vor.u32 %v563, %v564
  %v566 = vshll.u32 2102212464, %v554
  %v567 = vshrl.u32 920167782, %v555
  %v568 = vor.u32 %v566, %v567
  %v569 = vshll.u32 920167782, %v554
  %v570 = vshrl.u32 1326507024, %v555
  %v571 = vor.u32 %v569, %v570
  %vm572 = vcmp.lt.s32.totalorder %v553, 1
  %vm573 = vcmp.lt.s32.totalorder %v553, 2
  %vm574 = vcmp.lt.s32.totalorder %v553, 3
  %vm575 = vcmp.lt.s32.totalorder %v553, 4
  %v576 = vsel %vm572, %v556, %v559
  %v577 = vsel %vm575, %v565, 2102212464
  %v578 = vsel %vm574, %v562, %v577
  %v579 = vsel %vm573, %v576, %v578
  %v580 = vsel %vm572, %v559, %v562
  %v581 = vsel %vm575, %v568, 920167782
  %v582 = vsel %vm574, %v565, %v581
  %v583 = vsel %vm573, %v580, %v582
  %v584 = vsel %vm572, %v562, %v565
  %v585 = vsel %vm575, %v571, 1326507024
  %v586 = vsel %vm574, %v568, %v585
  %v587 = vsel %vm573, %v584, %v586
  %v588 = vshll.u32 %v548, 8
  %v589 = vmul.u32.u64.compose %v588, %v587
  %v590 = vextract.low.u32 %v589
  %v591 = vextract.high.u32 %v589
  %v592 = vmul.u32.u64.compose %v588, %v583
  %v593 = vextract.low.u32 %v592
  %v594 = vextract.high.u32 %v592
  %v595 = vmul.u32 %v588, %v579
  %v596 = vadd.s32 %v591, %v593
  %vm597 = vc.u32 %v591, %v593
  %v598 = vadd.s32 %v594, 1
  %v599 = vsel %vm597, %v598, %v594
  %v600 = vadd.s32 %v595, %v599
  %v601 = vadd.s32 %v600, 536870912
  %v602 = vshrl.u32 %v601, 30
  %v603 = vshll.u32 %v602, 30
  %v604 = vsub.s32 %v600, %v603
  %vm605 = vcmp.lt.s32.totalorder %v604, 0
  %v606 = vsub.s32 0, %v604
  %v607 = vsel %vm605, %v606, %v604
  %v608 = vclz %v607
  %v609 = vsub.s32 %v608, 2
  %vm610 = vcmp.gt.s32.totalorder 0, %v609
  %v611 = vsel %vm610, 0, %v609
  %v612 = vsub.s32 32, %v611
  %v613 = vshll.u32 %v604, %v611
  %v614 = vshrl.u32 %v596, %v612
  %v615 = vor.u32 %v613, %v614
  %v616 = vsub.s32 4294967266, %v611
  %v617 = vadd.s32 %v616, 127
  %v618 = vshll.u32 %v617, 23
  %v619 = vor.u32 4788187, %v618
  %v620 = vand.u32 2147483647, %v619
  %v622 = vcvt.s32.f32 %v615
  %v623 = vmul.f32 %v622, %v620
  %v624 = vxor.u32 %v623, 2147483648
  %v625 = vsel %vm542, %v624, %v623
  %v626 = vsub.s32 4, %v602
  %v627 = vsel %vm542, %v626, %v602
  %v628 = vsel %vm541, %v433, %v625
  %v629 = vsel %vm541, 0, %v627
  %v630 = vcosq.f32.pop %v628
  %v631 = vsinq.f32.pop %v628
  %vm632 = vweird.f32 %v433
  %v633 = vand.u32 %v629, 3
  %vm634 = vcmp.lt.s32.totalorder %v633, 2
  %vm635 = vcmp.eq.s32.totalorder %v633, 0
  %v636 = vxor.u32 %v631, 2147483648
  %v637 = vsel %vm635, %v630, %v636
  %vm638 = vcmp.eq.s32.totalorder %v633, 2
  %v639 = vxor.u32 %v630, 2147483648
  %v640 = vsel %vm638, %v639, %v631
  %v641 = vsel %vm634, %v637, %v640
  %v642 = vsel %vm632, nan, %v641
  %s643 = scalar_lea.vmem %s1, 48
  %644 = vst [vmem:[%s643] sm:$0xff] %v642
  %v645 = vmul.f32 %v8, 8.0
  %v646 = vand.u32 2147483647, %v645
  %vm647 = vcmp.le.f32.partialorder %v646, 0.7853982
  %vm648 = vcmp.lt.s32.totalorder %v645, 0
  %v649 = vand.u32 %v645, 2139095040
  %v650 = vshrl.u32 %v649, 23
  %v651 = vsub.s32 %v650, 127
  %v652 = vand.u32 2147483647, %v645
  %v653 = vand.u32 %v652, 8388607
  %v654 = vor.u32 %v653, 8388608
  %v655 = vsub.s32 0, %v654
  %v656 = vadd.s32 %v651, 1
  %vm657 = vcmp.gt.s32.totalorder %v656, 0
  %v658 = vsel %vm657, %v656, 0
  %v659 = vshrl.u32 %v658, 5
  %v660 = vand.u32 %v658, 31
  %v661 = vsub.s32 32, %v660
  %v662 = vshrl.u32 683565275, %v661
  %v663 = vshll.u32 683565275, %v660
  %v664 = vshrl.u32 2475754826, %v661
  %v665 = vor.u32 %v663, %v664
  %v666 = vshll.u32 2475754826, %v660
  %v667 = vshrl.u32 2131351028, %v661
  %v668 = vor.u32 %v666, %v667
  %v669 = vshll.u32 2131351028, %v660
  %v670 = vshrl.u32 2102212464, %v661
  %v671 = vor.u32 %v669, %v670
  %v672 = vshll.u32 2102212464, %v660
  %v673 = vshrl.u32 920167782, %v661
  %v674 = vor.u32 %v672, %v673
  %v675 = vshll.u32 920167782, %v660
  %v676 = vshrl.u32 1326507024, %v661
  %v677 = vor.u32 %v675, %v676
  %vm678 = vcmp.lt.s32.totalorder %v659, 1
  %vm679 = vcmp.lt.s32.totalorder %v659, 2
  %vm680 = vcmp.lt.s32.totalorder %v659, 3
  %vm681 = vcmp.lt.s32.totalorder %v659, 4
  %v682 = vsel %vm678, %v662, %v665
  %v683 = vsel %vm681, %v671, 2102212464
  %v684 = vsel %vm680, %v668, %v683
  %v685 = vsel %vm679, %v682, %v684
  %v686 = vsel %vm678, %v665, %v668
  %v687 = vsel %vm681, %v674, 920167782
  %v688 = vsel %vm680, %v671, %v687
  %v689 = vsel %vm679, %v686, %v688
  %v690 = vsel %vm678, %v668, %v671
  %v691 = vsel %vm681, %v677, 1326507024
  %v692 = vsel %vm680, %v674, %v691
  %v693 = vsel %vm679, %v690, %v692
  %v694 = vshll.u32 %v654, 8
  %v695 = vmul.u32.u64.compose %v694, %v693
  %v696 = vextract.low.u32 %v695
  %v697 = vextract.high.u32 %v695
  %v698 = vmul.u32.u64.compose %v694, %v689
  %v699 = vextract.low.u32 %v698
  %v700 = vextract.high.u32 %v698
  %v701 = vmul.u32 %v694, %v685
  %v702 = vadd.s32 %v697, %v699
  %vm703 = vc.u32 %v697, %v699
  %v704 = vadd.s32 %v700, 1
  %v705 = vsel %vm703, %v704, %v700
  %v706 = vadd.s32 %v701, %v705
  %v707 = vadd.s32 %v706, 536870912
  %v708 = vshrl.u32 %v707, 30
  %v709 = vshll.u32 %v708, 30
  %v710 = vsub.s32 %v706, %v709
  %vm711 = vcmp.lt.s32.totalorder %v710, 0
  %v712 = vsub.s32 0, %v710
  %v713 = vsel %vm711, %v712, %v710
  %v714 = vclz %v713
  %v715 = vsub.s32 %v714, 2
  %vm716 = vcmp.gt.s32.totalorder 0, %v715
  %v717 = vsel %vm716, 0, %v715
  %v718 = vsub.s32 32, %v717
  %v719 = vshll.u32 %v710, %v717
  %v720 = vshrl.u32 %v702, %v718
  %v721 = vor.u32 %v719, %v720
  %v722 = vsub.s32 4294967266, %v717
  %v723 = vadd.s32 %v722, 127
  %v724 = vshll.u32 %v723, 23
  %v725 = vor.u32 4788187, %v724
  %v726 = vand.u32 2147483647, %v725
  %v728 = vcvt.s32.f32 %v721
  %v729 = vmul.f32 %v728, %v726
  %v730 = vxor.u32 %v729, 2147483648
  %v731 = vsel %vm648, %v730, %v729
  %v732 = vsub.s32 4, %v708
  %v733 = vsel %vm648, %v732, %v708
  %v734 = vsel %vm647, %v645, %v731
  %v735 = vsel %vm647, 0, %v733
  %v736 = vcosq.f32.pop %v734
  %v737 = vsinq.f32.pop %v734
  %vm738 = vweird.f32 %v645
  %v739 = vadd.s32 %v735, 3
  %v740 = vand.u32 %v739, 3
  %vm741 = vcmp.lt.s32.totalorder %v740, 2
  %vm742 = vcmp.eq.s32.totalorder %v740, 0
  %v743 = vxor.u32 %v737, 2147483648
  %v744 = vsel %vm742, %v736, %v743
  %vm745 = vcmp.eq.s32.totalorder %v740, 2
  %v746 = vxor.u32 %v736, 2147483648
  %v747 = vsel %vm745, %v746, %v737
  %v748 = vsel %vm741, %v744, %v747
  %v749 = vsel %vm738, nan, %v748
  %s750 = scalar_lea.vmem %s1, 56
  %751 = vst [vmem:[%s750] sm:$0xff] %v749
  %v752 = vand.u32 2147483647, %v645
  %vm753 = vcmp.le.f32.partialorder %v752, 0.7853982
  %vm754 = vcmp.lt.s32.totalorder %v645, 0
  %v755 = vand.u32 %v645, 2139095040
  %v756 = vshrl.u32 %v755, 23
  %v757 = vsub.s32 %v756, 127
  %v758 = vand.u32 2147483647, %v645
  %v759 = vand.u32 %v758, 8388607
  %v760 = vor.u32 %v759, 8388608
  %v761 = vsub.s32 0, %v760
  %v762 = vadd.s32 %v757, 1
  %vm763 = vcmp.gt.s32.totalorder %v762, 0
  %v764 = vsel %vm763, %v762, 0
  %v765 = vshrl.u32 %v764, 5
  %v766 = vand.u32 %v764, 31
  %v767 = vsub.s32 32, %v766
  %v768 = vshrl.u32 683565275, %v767
  %v769 = vshll.u32 683565275, %v766
  %v770 = vshrl.u32 2475754826, %v767
  %v771 = vor.u32 %v769, %v770
  %v772 = vshll.u32 2475754826, %v766
  %v773 = vshrl.u32 2131351028, %v767
  %v774 = vor.u32 %v772, %v773
  %v775 = vshll.u32 2131351028, %v766
  %v776 = vshrl.u32 2102212464, %v767
  %v777 = vor.u32 %v775, %v776
  %v778 = vshll.u32 2102212464, %v766
  %v779 = vshrl.u32 920167782, %v767
  %v780 = vor.u32 %v778, %v779
  %v781 = vshll.u32 920167782, %v766
  %v782 = vshrl.u32 1326507024, %v767
  %v783 = vor.u32 %v781, %v782
  %vm784 = vcmp.lt.s32.totalorder %v765, 1
  %vm785 = vcmp.lt.s32.totalorder %v765, 2
  %vm786 = vcmp.lt.s32.totalorder %v765, 3
  %vm787 = vcmp.lt.s32.totalorder %v765, 4
  %v788 = vsel %vm784, %v768, %v771
  %v789 = vsel %vm787, %v777, 2102212464
  %v790 = vsel %vm786, %v774, %v789
  %v791 = vsel %vm785, %v788, %v790
  %v792 = vsel %vm784, %v771, %v774
  %v793 = vsel %vm787, %v780, 920167782
  %v794 = vsel %vm786, %v777, %v793
  %v795 = vsel %vm785, %v792, %v794
  %v796 = vsel %vm784, %v774, %v777
  %v797 = vsel %vm787, %v783, 1326507024
  %v798 = vsel %vm786, %v780, %v797
  %v799 = vsel %vm785, %v796, %v798
  %v800 = vshll.u32 %v760, 8
  %v801 = vmul.u32.u64.compose %v800, %v799
  %v802 = vextract.low.u32 %v801
  %v803 = vextract.high.u32 %v801
  %v804 = vmul.u32.u64.compose %v800, %v795
  %v805 = vextract.low.u32 %v804
  %v806 = vextract.high.u32 %v804
  %v807 = vmul.u32 %v800, %v791
  %v808 = vadd.s32 %v803, %v805
  %vm809 = vc.u32 %v803, %v805
  %v810 = vadd.s32 %v806, 1
  %v811 = vsel %vm809, %v810, %v806
  %v812 = vadd.s32 %v807, %v811
  %v813 = vadd.s32 %v812, 536870912
  %v814 = vshrl.u32 %v813, 30
  %v815 = vshll.u32 %v814, 30
  %v816 = vsub.s32 %v812, %v815
  %vm817 = vcmp.lt.s32.totalorder %v816, 0
  %v818 = vsub.s32 0, %v816
  %v819 = vsel %vm817, %v818, %v816
  %v820 = vclz %v819
  %v821 = vsub.s32 %v820, 2
  %vm822 = vcmp.gt.s32.totalorder 0, %v821
  %v823 = vsel %vm822, 0, %v821
  %v824 = vsub.s32 32, %v823
  %v825 = vshll.u32 %v816, %v823
  %v826 = vshrl.u32 %v808, %v824
  %v827 = vor.u32 %v825, %v826
  %v828 = vsub.s32 4294967266, %v823
  %v829 = vadd.s32 %v828, 127
  %v830 = vshll.u32 %v829, 23
  %v831 = vor.u32 4788187, %v830
  %v832 = vand.u32 2147483647, %v831
  %v834 = vcvt.s32.f32 %v827
  %v835 = vmul.f32 %v834, %v832
  %v836 = vxor.u32 %v835, 2147483648
  %v837 = vsel %vm754, %v836, %v835
  %v838 = vsub.s32 4, %v814
  %v839 = vsel %vm754, %v838, %v814
  %v840 = vsel %vm753, %v645, %v837
  %v841 = vsel %vm753, 0, %v839
  %v842 = vcosq.f32.pop %v840
  %v843 = vsinq.f32.pop %v840
  %vm844 = vweird.f32 %v645
  %v845 = vand.u32 %v841, 3
  %vm846 = vcmp.lt.s32.totalorder %v845, 2
  %vm847 = vcmp.eq.s32.totalorder %v845, 0
  %v848 = vxor.u32 %v843, 2147483648
  %v849 = vsel %vm847, %v842, %v848
  %vm850 = vcmp.eq.s32.totalorder %v845, 2
  %v851 = vxor.u32 %v842, 2147483648
  %v852 = vsel %vm850, %v851, %v843
  %v853 = vsel %vm846, %v849, %v852
  %v854 = vsel %vm844, nan, %v853
  %s855 = scalar_lea.vmem %s1, 64
  %856 = vst [vmem:[%s855] sm:$0xff] %v854
  // Predicated region
  $region6: #{embed_impl.1} parent=0 // pred_check
    _
  $region7: #{embed_impl.1} parent=0 // pred_check_branch
    %858 = sbr.rel (0) target = $region9
  $region8: #{embed_impl.1} parent=0 // pred_region
    _
  $region9: #{embed_impl.1} parent=0 // pred_fallthru
    _
  // Predicated region
  $region10: #{embed_impl.1} parent=0 // pred_check
    _
  $region11: #{embed_impl.1} parent=0 // pred_check_branch
    %860 = sbr.rel (0) target = $region13
  $region12: #{embed_impl.1} parent=0 // pred_region
    _
  $region13: #{embed_impl.1} parent=0 // pred_fallthru
    _

</llo_original>
